<compile_context>
chip_gen: v5e
topology: v5e:2x2
jax: 0.10.0
libtpu: 0.0.40
codegen_flags: <defaults>
</compile_context>

<pallas_src>
import functools

import jax
import jax.numpy as jnp
from jax.experimental import pallas as pl
from jax.experimental.pallas import tpu as pltpu


def attention_kernel(hidw_ref, enc_ref, out_ref, *, s_valid):
    # hidw_ref : (Bt, T, De)      pre-projected decoder hidden (hidden @ W)
    # enc_ref  : (Bt, S_pad, De)  encoder outputs (batch tile, S padded to 128k)
    # out_ref  : (Bt, T, S_pad)   softmax(scores), lane-dense last dim
    hid_w = hidw_ref[...]
    enc = enc_ref[...]

    # scores[b, t, s] = sum_e hid_w[b, t, e] * enc[b, s, e]
    # Batched dot contracting matching minor dims -> MXU-friendly, no .T.
    scores = jnp.einsum("bte,bse->bts", hid_w, enc,
                        preferred_element_type=jnp.float32)    # (Bt, T, S_pad) f32

    # Softmax over the source (last, lane) dimension in f32.  Padded source
    # rows are zero-padded in the wrapper, so their scores are exactly 0;
    # including them in the max is harmless, we just exclude them from the sum.
    m = jnp.max(scores, axis=-1, keepdims=True)
    e = jnp.exp(scores - m)

    if s_valid != scores.shape[-1]:
        # Cheap (1, 1, S_pad) lane mask instead of a full-size iota + select.
        lane = jax.lax.broadcasted_iota(jnp.int32, (1, 1, scores.shape[-1]), 2)
        e = e * (lane < s_valid).astype(e.dtype)

    denom = jnp.sum(e, axis=-1, keepdims=True)
    # approx=False to preserve exact module semantics / 1e-5 test tolerance.
    sm = e * pl.reciprocal(denom, approx=False)
    out_ref[...] = sm.astype(out_ref.dtype)


def attention_forward(hidden, encoder_outputs, weight, bias=None, *, block_b=None):
    """hidden: [T, B, Dd], encoder_outputs: [S, B, De], weight: [Dd, De], bias: [Dd].

    Returns softmax(scores) with shape [B, T, S] (matches the PyTorch module).
    The bias is accepted for API parity but is mathematically a no-op under the
    softmax over the source dimension, so it is not used.
    """
    del bias  # softmax(x + const_over_S) == softmax(x)

    T, B, Dd = hidden.shape
    S, _, De = encoder_outputs.shape

    LANE = 128
    S_pad = ((S + LANE - 1) // LANE) * LANE

    dt = hidden.dtype

    # Hoisted projection of the SMALL tensor (hidden), emitted batch-major.
    # One full-size XLA matmul at full MXU utilization; bias dropped.
    hid_w = jnp.einsum("tbd,de->bte", hidden, weight.astype(dt)).astype(dt)  # [B, T, De]

    # Batch-major encoder copy (single XLA transpose), padded to lane-dense S.
    enc_b = jnp.transpose(encoder_outputs, (1, 0, 2))        # [B, S, De]
    if S_pad != S:
        enc_b = jnp.pad(enc_b, ((0, 0), (0, S_pad - S), (0, 0)))
    enc_b = enc_b.astype(dt)

    out_dtype = dt
    in_bytes = jnp.dtype(dt).itemsize
    out_bytes = jnp.dtype(out_dtype).itemsize

    # VMEM cost of one batch row of blocks: double-buffered inputs/outputs plus
    # the f32 intermediates (scores / e / softmax) and the f32 hid_w temp.
    per_batch = (2 * S_pad * De * in_bytes        # enc block  (x2 buffers)
                 + 2 * T * De * in_bytes          # hid_w block (x2 buffers)
                 + 2 * T * S_pad * out_bytes      # out block   (x2 buffers)
                 + 3 * T * S_pad * 4              # f32 temps
                 + T * De * 4)
    VMEM_BUDGET = 24 * 2**20                      # conservative: fits v7x 64 MiB VMEM

    if block_b is None:
        block_b = max(1, min(B, VMEM_BUDGET // max(per_batch, 1)))
        if B >= 2:
            # Keep >= 2 grid steps so both v7x TensorCores get work.
            block_b = min(block_b, pl.cdiv(B, 2))
        # Prefer a block that divides B: no partial trailing block (no OOB
        # garbage rows, no masked partial-block stores).
        while block_b > 1 and B % block_b:
            block_b -= 1
    grid_b = pl.cdiv(B, block_b)

    vmem_limit = int(min(max(2 * block_b * per_batch, 32 * 2**20), 48 * 2**20))

    kernel = functools.partial(attention_kernel, s_valid=S)

    out = pl.pallas_call(
        kernel,
        out_shape=jax.ShapeDtypeStruct((B, T, S_pad), out_dtype),
        grid_spec=pltpu.PrefetchScalarGridSpec(
            num_scalar_prefetch=0,
            grid=(grid_b,),
            in_specs=[
                pl.BlockSpec((block_b, T, De), lambda b: (b, 0, 0)),       # hid @ W
                pl.BlockSpec((block_b, S_pad, De), lambda b: (b, 0, 0)),   # encoder outs
            ],
            out_specs=pl.BlockSpec((block_b, T, S_pad), lambda b: (b, 0, 0)),
        ),
        compiler_params=pltpu.CompilerParams(
            dimension_semantics=("parallel",),
            vmem_limit_bytes=vmem_limit),
    )(hid_w, enc_b)

    if S_pad != S:
        out = out[:, :, :S]
    return out


def reference_forward(hidden, encoder_outputs, weight, bias):
    # Pure-JAX reference identical to the PyTorch forward (bias included).
    output = jnp.einsum("sbe,de->sbd", encoder_outputs, weight) + bias    # [S, B, Dd]
    hid_b = jnp.transpose(hidden, (1, 0, 2))                              # [B, T, Dd]
    out_b = jnp.transpose(output, (1, 2, 0))                              # [B, Dd, S]
    scores = jnp.einsum("btd,bds->bts", hid_b, out_b)                     # [B, T, S]
    return jax.nn.softmax(scores, axis=2)


if __name__ == "__main__":
    # Small shapes consistent with the module's forward.
    T, B, S = 4, 2, 8           # decoder steps, batch, source length
    enc_hid_dim, dec_hid_dim = 32, 16

    key = jax.random.PRNGKey(0)
    k_hid, k_enc, k_w, k_b = jax.random.split(key, 4)

    hidden = jax.random.normal(k_hid, (T, B, dec_hid_dim), dtype=jnp.float32)
    encoder_outputs = jax.random.normal(k_enc, (S, B, enc_hid_dim), dtype=jnp.float32)

    # Deterministic parameter init (shapes per nn.Linear(enc_hid_dim, dec_hid_dim)).
    bound = 1.0 / (enc_hid_dim ** 0.5)
    weight = jax.random.uniform(k_w, (dec_hid_dim, enc_hid_dim),
                                minval=-bound, maxval=bound, dtype=jnp.float32)
    bias = jax.random.uniform(k_b, (dec_hid_dim,),
                              minval=-bound, maxval=bound, dtype=jnp.float32)

    out = attention_forward(hidden, encoder_outputs, weight, bias)
    out = jax.block_until_ready(out)

    ref = reference_forward(hidden, encoder_outputs, weight, bias)
    assert out.shape == (B, T, S)
    assert jnp.allclose(out, ref, atol=1e-5, rtol=1e-5), float(jnp.max(jnp.abs(out - ref)))

    print("KERNEL_OK")
</pallas_src>

<mosaic_0001>
module attributes {stable_mosaic.version = 11 : i64} {
  func.func @attention_kernel(%arg0: i32, %arg1: memref<1x4x32xf32, #tpu.memory_space<vmem>>, %arg2: memref<1x128x32xf32, #tpu.memory_space<vmem>>, %arg3: memref<1x4x128xf32, #tpu.memory_space<vmem>>) attributes {dimension_semantics = [#tpu.dimension_semantics<parallel>], iteration_bounds = array<i64: 2>, scalar_prefetch = 0 : i64, scratch_operands = 0 : i64, tpu.core_type = #tpu.core_type<tc>, window_params = [{transform_indices = @transform_0, window_bounds = array<i64: 1, 4, 32>}, {transform_indices = @transform_1, window_bounds = array<i64: 1, 128, 32>}, {transform_indices = @transform_2, window_bounds = array<i64: 1, 4, 128>}]} {
    %c0 = arith.constant 0 : index
    %c0_0 = arith.constant 0 : index
    %c0_1 = arith.constant 0 : index
    %0 = vector.load %arg1[%c0, %c0_0, %c0_1] : memref<1x4x32xf32, #tpu.memory_space<vmem>>, vector<1x4x32xf32>
    %c0_2 = arith.constant 0 : index
    %c0_3 = arith.constant 0 : index
    %c0_4 = arith.constant 0 : index
    %1 = vector.load %arg2[%c0_2, %c0_3, %c0_4] : memref<1x128x32xf32, #tpu.memory_space<vmem>>, vector<1x128x32xf32>
    "tpu.trace_start"() <{level = 10 : i32, message = "bte,bse->bts"}> : () -> ()
    %cst = arith.constant dense<0.000000e+00> : vector<1x4x128xf32>
    %2 = tpu.matmul %0, %1, %cst {dimension_numbers = #tpu.dot_dimension_numbers<[2], [2], [1], [1], [0, 0, 0, 1, 1, 1], [0], [0]>} : vector<1x4x32xf32>, vector<1x128x32xf32>, vector<1x4x128xf32> -> vector<1x4x128xf32>
    "tpu.trace_stop"() : () -> ()
    %cst_5 = arith.constant dense<0xFF800000> : vector<1x4xf32>
    %3 = vector.multi_reduction <maximumf>, %2, %cst_5 [2] : vector<1x4x128xf32> to vector<1x4xf32>
    %4 = vector.shape_cast %3 : vector<1x4xf32> to vector<1x4x1xf32>
    %5 = vector.broadcast %4 : vector<1x4x1xf32> to vector<1x4x128xf32>
    %6 = arith.subf %2, %5 : vector<1x4x128xf32>
    %7 = math.exp %6 : vector<1x4x128xf32>
    %8 = tpu.iota {dimensions = array<i32: 2>} : vector<1x1x128xi32>
    %c8_i32 = arith.constant 8 : i32
    %9 = vector.broadcast %c8_i32 : i32 to vector<1x1x128xi32>
    %10 = arith.cmpi slt, %8, %9 : vector<1x1x128xi32>
    %11 = arith.extui %10 : vector<1x1x128xi1> to vector<1x1x128xi32>
    %12 = arith.sitofp %11 : vector<1x1x128xi32> to vector<1x1x128xf32>
    %13 = vector.broadcast %12 : vector<1x1x128xf32> to vector<1x4x128xf32>
    %14 = arith.mulf %7, %13 : vector<1x4x128xf32>
    %cst_6 = arith.constant dense<0.000000e+00> : vector<1x4xf32>
    %15 = vector.multi_reduction <add>, %14, %cst_6 [2] : vector<1x4x128xf32> to vector<1x4xf32>
    %16 = vector.shape_cast %15 : vector<1x4xf32> to vector<1x4x1xf32>
    %17 = tpu.reciprocal %16 : vector<1x4x1xf32> -> vector<1x4x1xf32>
    %18 = vector.broadcast %17 : vector<1x4x1xf32> to vector<1x4x128xf32>
    %19 = arith.mulf %14, %18 : vector<1x4x128xf32>
    %c0_7 = arith.constant 0 : index
    %c0_8 = arith.constant 0 : index
    %c0_9 = arith.constant 0 : index
    %20 = vector.load %arg3[%c0_7, %c0_8, %c0_9] : memref<1x4x128xf32, #tpu.memory_space<vmem>>, vector<1x4x128xf32>
    tpu.vector_store %arg3[%c0_7, %c0_8, %c0_9], %19 {strides = array<i32>} : memref<1x4x128xf32, #tpu.memory_space<vmem>>, vector<1x4x128xf32>,
    return
  }
  func.func @transform_0(%arg0: i32) -> (i32, i32, i32) {
    %c0_i32 = arith.constant 0 : i32
    %c0_i32_0 = arith.constant 0 : i32
    %c0_i32_1 = arith.constant 0 : i32
    return %arg0, %c0_i32, %c0_i32_0 : i32, i32, i32
  }
  func.func @transform_1(%arg0: i32) -> (i32, i32, i32) {
    %c0_i32 = arith.constant 0 : i32
    %c0_i32_0 = arith.constant 0 : i32
    %c0_i32_1 = arith.constant 0 : i32
    return %arg0, %c0_i32, %c0_i32_0 : i32, i32, i32
  }
  func.func @transform_2(%arg0: i32) -> (i32, i32, i32) {
    %c0_i32 = arith.constant 0 : i32
    %c0_i32_0 = arith.constant 0 : i32
    %c0_i32_1 = arith.constant 0 : i32
    return %arg0, %c0_i32, %c0_i32_0 : i32, i32, i32
  }
}

</mosaic_0001>

<llo_original>
// kernel: tpu_custom_call.1
$region0: #{tpu_custom_call.1}
  #allocation0 [shape = 'u32[]', space=smem, size = 0x4, offset = 0x4, fixed_abs, tag = 'smem constant byte address 0x4 - core index']
  #allocation1 [shape = 'u32[72,128]{1,0:T(1,128)}', space=vmem, size = 0x9000, scoped, tag = 'internal scratch']
  %s0 = inlined_call_operand.vmem [shape: f32[2,4,32], index: 0, kind: input, shape index: {}]
  %s1 = inlined_call_operand.vmem [shape: f32[2,128,32], index: 1, kind: input, shape index: {}]
  %s2 = inlined_call_operand.hbm [shape: f32[2,4,128], index: 2, kind: output, shape index: {}]
  %s3 = sld [smem:[#allocation0]]
  $region41: #{tpu_custom_call.1} parent=0
    _
  %s5 = ssub.s32 1, %s3
  %s6 = scalar_select 0, %s5, %s3
  $region1: #{tpu_custom_call.1} parent=0
    #allocation2 [shape = 'u8[4096]{0}', space=vmem, size = 0x1000, scoped, tag = 'output window, operand 0']
    #allocation3 [shape = 's32[2]{0}', space=sflag, size = 0x8, scoped, tag = 'scoped memory for tpu_custom_call.1']
    %7 = vsyncpa [#allocation3], 0
    %s8 = scalar_lea.sflag [#allocation3], 1
    %9 = vsyncpa %s8, 0
    loop: start=0, step=1, limit=4
    $region2: #{tpu_custom_call.1} parent=1 // loop_pre_header
      _
    $region3: #{tpu_custom_call.1} parent=1 // loop_header
      %s11 = sphi 0, %s15
      %p12 = scmp.ge.s32.totalorder %s11, 4
      %s21 = sphi 0, %s23
      %s24 = sphi 0, %s21
      %s25 = sphi 0, %s24
      %s41 = sphi 0, %s25
      %s47 = sphi 0, %s49
      %s50 = sphi 0, %s47
      %s51 = sphi 0, %s50
      %s67 = sphi 0, %s51
      %s73 = sphi 0, %s75
      %s76 = sphi 0, %s73
      %s77 = sphi 0, %s76
      %s93 = sphi 0, %s77
    $region4: #{tpu_custom_call.1} parent=1 // loop_header_branch
      %14 = sbr.rel (%p12) target = $region8
    $region5: #{tpu_custom_call.1} parent=1 // loop_body
      %s16 = ssub.s32 %s11, 1
      %s17 = ssub.s32 %s11, 2
      %s18 = sadd.s32 %s11, 1
      %s19 = ssub.s32 %s11, %s18
      %p20 = scmp.eq.s32.totalorder %s19, 0
      %s22 = sadd.s32 %s21, 1
      %s23 = scalar_select %p20, %s21, %s22
      %p26 = pneg %p20
      %p27 = scmp.eq.s32.totalorder %s11, 1
      %p28 = por %p26, %p27
      %p29 = scmp.ne.s32.totalorder %s21, %s24
      %p30 = scmp.eq.s32.totalorder %s11, 0
      %p31 = por %p29, %p30
      %p32 = scmp.ne.s32.totalorder %s21, %s24
      %p33 = scmp.eq.s32.totalorder %s16, 1
      %p34 = por %p32, %p33
      %p35 = scmp.ne.s32.totalorder %s24, %s25
      %p36 = scmp.eq.s32.totalorder %s16, 0
      %p37 = por %p35, %p36
      %p38 = scmp.ne.s32.totalorder %s24, %s25
      %p39 = scmp.eq.s32.totalorder %s17, 1
      %p40 = por %p38, %p39
      %p42 = scmp.ne.s32.totalorder %s25, %s41
      %p43 = scmp.eq.s32.totalorder %s17, 0
      %p44 = por %p42, %p43
      %s45 = ssub.s32 %s11, %s18
      %p46 = scmp.eq.s32.totalorder %s45, 0
      %s48 = sadd.s32 %s47, 1
      %s49 = scalar_select %p46, %s47, %s48
      %p52 = pneg %p46
      %p53 = scmp.eq.s32.totalorder %s11, 1
      %p54 = por %p52, %p53
      %p55 = scmp.ne.s32.totalorder %s47, %s50
      %p56 = scmp.eq.s32.totalorder %s11, 0
      %p57 = por %p55, %p56
      %p58 = scmp.ne.s32.totalorder %s47, %s50
      %p59 = scmp.eq.s32.totalorder %s16, 1
      %p60 = por %p58, %p59
      %p61 = scmp.ne.s32.totalorder %s50, %s51
      %p62 = scmp.eq.s32.totalorder %s16, 0
      %p63 = por %p61, %p62
      %p64 = scmp.ne.s32.totalorder %s50, %s51
      %p65 = scmp.eq.s32.totalorder %s17, 1
      %p66 = por %p64, %p65
      %p68 = scmp.ne.s32.totalorder %s51, %s67
      %p69 = scmp.eq.s32.totalorder %s17, 0
      %p70 = por %p68, %p69
      %s71 = ssub.s32 %s11, %s18
      %p72 = scmp.eq.s32.totalorder %s71, 0
      %s74 = sadd.s32 %s73, 1
      %s75 = scalar_select %p72, %s73, %s74
      %p78 = pneg %p72
      %p79 = scmp.eq.s32.totalorder %s11, 1
      %p80 = por %p78, %p79
      %p81 = scmp.ne.s32.totalorder %s73, %s76
      %p82 = scmp.eq.s32.totalorder %s11, 0
      %p83 = por %p81, %p82
      %p84 = scmp.ne.s32.totalorder %s73, %s76
      %p85 = scmp.eq.s32.totalorder %s16, 1
      %p86 = por %p84, %p85
      %p87 = scmp.ne.s32.totalorder %s76, %s77
      %p88 = scmp.eq.s32.totalorder %s16, 0
      %p89 = por %p87, %p88
      %p90 = scmp.ne.s32.totalorder %s76, %s77
      %p91 = scmp.eq.s32.totalorder %s17, 1
      %p92 = por %p90, %p91
      %p94 = scmp.ne.s32.totalorder %s77, %s93
      %p95 = scmp.eq.s32.totalorder %s17, 0
      %p96 = por %p94, %p95
      %p97 = scmp.le.s32.totalorder 1, %s11
      %p98 = scmp.lt.s32.totalorder %s11, 3
      %p99 = pnand %p97, %p98
      %p100 = pneg %p99
      // Predicated region
      $region9: #{tpu_custom_call.1} parent=5 // pred_check
        _
      $region10: #{tpu_custom_call.1} parent=5 // pred_check_branch
        %102 = sbr.rel (%p99) target = $region12
      $region11: #{tpu_custom_call.1} parent=5 // pred_region
        %s103 = ssub.s32 %s11, 1
      $region12: #{tpu_custom_call.1} parent=5 // pred_fallthru
        _
      %p104 = scmp.lt.s32.totalorder %s11, 2
      // Predicated region
      $region13: #{tpu_custom_call.1} parent=5 // pred_check
        %p105 = pneg %p104
      $region14: #{tpu_custom_call.1} parent=5 // pred_check_branch
        %107 = sbr.rel (%p105) target = $region16
      $region15: #{tpu_custom_call.1} parent=5 // pred_region
        // Predicated region
        $region17: #{tpu_custom_call.1} parent=15 // pred_check
          %p108 = pneg %p31
        $region18: #{tpu_custom_call.1} parent=15 // pred_check_branch
          %110 = sbr.rel (%p108) target = $region20
        $region19: #{tpu_custom_call.1} parent=15 // pred_region
          %p111 = scmp.lt.s32.totalorder %s11, 1
          %s112 = scalar_select %p111, %s11, 1
          %s113 = smul.addr %s112, 4
          %s114 = scalar_lea.vmem %s0, %s113
        $region20: #{tpu_custom_call.1} parent=15 // pred_fallthru
          _
        // Predicated region
        $region21: #{tpu_custom_call.1} parent=15 // pred_check
          %p115 = pneg %p57
        $region22: #{tpu_custom_call.1} parent=15 // pred_check_branch
          %117 = sbr.rel (%p115) target = $region24
        $region23: #{tpu_custom_call.1} parent=15 // pred_region
          %p118 = scmp.lt.s32.totalorder %s11, 1
          %s119 = scalar_select %p118, %s11, 1
          %s120 = smul.addr %s119, 16
          %s121 = smul.addr %s120, 8
          %s122 = scalar_lea.vmem %s1, %s121
        $region24: #{tpu_custom_call.1} parent=15 // pred_fallthru
          _
      $region16: #{tpu_custom_call.1} parent=5 // pred_fallthru
        _
      %p123 = scmp.le.s32.totalorder 1, %s11
      %p124 = scmp.lt.s32.totalorder %s11, 3
      %p125 = pnand %p123, %p124
      %p126 = pneg %p125
      // Predicated region
      $region25: #{tpu_custom_call.1} parent=5 // pred_check
        _
      $region26: #{tpu_custom_call.1} parent=5 // pred_check_branch
        %128 = sbr.rel (%p125) target = $region28
      $region27: #{tpu_custom_call.1} parent=5 // pred_region
        %s129 = ssub.s32 %s11, 1
        %p130 = scmp.lt.s32.totalorder %s16, 1
        %s131 = scalar_select %p130, %s16, 1
        %s132 = smul.addr %s131, 4
        %s133 = scalar_lea.vmem %s0, %s132
        %p134 = pneg %p37
        %p135 = pneg %p34
        %p136 = scmp.lt.s32.totalorder %s16, 1
        %s137 = scalar_select %p136, %s16, 1
        %s138 = smul.addr %s137, 16
        %s139 = smul.addr %s138, 8
        %s140 = scalar_lea.vmem %s1, %s139
        %p141 = pneg %p63
        %p142 = pneg %p60
        %p143 = pneg %p89
        %p144 = pneg %p86
        %s145 = sand.u32 %s76, 1
        %s146 = scalar_lea.sflag [#allocation3], %s145
        %s147 = sand.u32 %s76, 1
        %s148 = smul.addr %s147, 4
        %s149 = scalar_lea.vmem [#allocation2], %s148
        %p150 = scmp.lt.s32.totalorder %s16, 1
        %s151 = scalar_select %p150, %s16, 1
        %s152 = smul.addr %s151, 4
        %s153 = scalar_lea.vmem %s0, %s152
        %p154 = scmp.lt.s32.totalorder %s16, 1
        %s155 = scalar_select %p154, %s16, 1
        %s156 = smul.addr %s155, 16
        %s157 = smul.addr %s156, 8
        %s158 = scalar_lea.vmem %s1, %s157
        %v159 = vld [vmem:[%s153] sm:$0xf]
        %v160 = vld [vmem:[%s158] sm:$0xff]
        %v161 = vld [vmem:[%s158 + $0x8] sm:$0xff]
        %v162 = vld [vmem:[%s158 + $0x10] sm:$0xff]
        %v163 = vld [vmem:[%s158 + $0x18] sm:$0xff]
        %v164 = vld [vmem:[%s158 + $0x20] sm:$0xff]
        %v165 = vld [vmem:[%s158 + $0x28] sm:$0xff]
        %v166 = vld [vmem:[%s158 + $0x30] sm:$0xff]
        %v167 = vld [vmem:[%s158 + $0x38] sm:$0xff]
        %v168 = vld [vmem:[%s158 + $0x40] sm:$0xff]
        %v169 = vld [vmem:[%s158 + $0x48] sm:$0xff]
        %v170 = vld [vmem:[%s158 + $0x50] sm:$0xff]
        %v171 = vld [vmem:[%s158 + $0x58] sm:$0xff]
        %v172 = vld [vmem:[%s158 + $0x60] sm:$0xff]
        %v173 = vld [vmem:[%s158 + $0x68] sm:$0xff]
        %v174 = vld [vmem:[%s158 + $0x70] sm:$0xff]
        %v175 = vld [vmem:[%s158 + $0x78] sm:$0xff]
        %vm176 = vcmask 261120
        %v178 = vsel %vm176, %v159, 0
        %v181 = vsel %vm176, %v160, 0
        %v184 = vsel %vm176, %v161, 0
        %v187 = vsel %vm176, %v162, 0
        %v190 = vsel %vm176, %v163, 0
        %v193 = vsel %vm176, %v164, 0
        %v196 = vsel %vm176, %v165, 0
        %v199 = vsel %vm176, %v166, 0
        %v202 = vsel %vm176, %v167, 0
        %v205 = vsel %vm176, %v168, 0
        %v208 = vsel %vm176, %v169, 0
        %v211 = vsel %vm176, %v170, 0
        %v214 = vsel %vm176, %v171, 0
        %v217 = vsel %vm176, %v172, 0
        %v220 = vsel %vm176, %v173, 0
        %v223 = vsel %vm176, %v174, 0
        %v226 = vsel %vm176, %v175, 0
        %228 = vmatpush.xpose.msra.mxu0 %v226
        %229 = vmatpush.xpose.msra.mxu0 %v223
        %230 = vmatpush.xpose.msra.mxu0 %v220
        %231 = vmatpush.xpose.msra.mxu0 %v217
        %232 = vmatpush.xpose.msra.mxu0 %v214
        %233 = vmatpush.xpose.msra.mxu0 %v211
        %234 = vmatpush.xpose.msra.mxu0 %v208
        %235 = vmatpush.xpose.msra.mxu0 %v205
        %236 = vmatpush.xpose.msra.mxu0 %v202
        %237 = vmatpush.xpose.msra.mxu0 %v199
        %238 = vmatpush.xpose.msra.mxu0 %v196
        %239 = vmatpush.xpose.msra.mxu0 %v193
        %240 = vmatpush.xpose.msra.mxu0 %v190
        %241 = vmatpush.xpose.msra.mxu0 %v187
        %242 = vmatpush.xpose.msra.mxu0 %v184
        %243 = vmatpush.xpose.msra.mxu0 %v181
        %244 = vmatmul.f32.gmra.mxu0 %v178
        %v245 = vpop.f32.mrf.mxu0
        %v246 = vadd.f32 0.0, %v245
        %247 = vdwg.mxu0
        %vm248 = vcmask 1043456
        %v249 = vsel %vm248, %v246, -inf
        %250 = vmax.xlane.f32.xlu0 %v249
        %v251 = vpop.xlane.xlu0 %250
        %v252 = vsub.f32 %v246, %v251
        %v253 = vmul.f32 %v252, 1.442695
        %v254 = vpow.pop %v253
        %v255 = vlaneseq
        %v256 = vand.u32 %v255, 127
        %vm257 = vcmp.lt.s32.totalorder %v256, 8
        %v258 = vsel %vm257, 1, 0
        %v259 = vcvt.s32.f32 %v258
        %v260 = vmul.f32 %v254, %v259
        %v261 = vsel %vm248, %v260, 0.0
        %262 = vadd.xlane.f32.xlu0 %v261
        %v263 = vpop.xlane.xlu0 %262
        %v264 = vrcp.pop %v263
        %v265 = vmul.f32 %v263, %v264
        %v266 = vsub.f32 1.0, %v265
        %v267 = vmul.f32 %v264, %v266
        %v268 = vadd.f32 %v264, %v267
        %vm269 = vweird.f32 %v263
        %vm270 = vweird.f32 %v264
        %vm271 = vmor %vm269, %vm270
        %v272 = vsel %vm271, %v264, %v268
        %v273 = vand.u32 2147483647, %v263
        %vm274 = vcmp.eq.f32.partialorder %v273, 8.507059e+37
        %v275 = vand.u32 %v263, 2147483648
        %v276 = vor.u32 1.1754944e-38, %v275
        %v277 = vsel %vm274, %v276, %v272
        %v278 = vmul.f32 %v260, %v277
        %279 = vst [vmem:[%s149] sm:$0xf] %v278
        %s280 = sand.u32 %s76, 1
        %s281 = scalar_lea.sflag [#allocation3], %s280
        %s282 = sand.u32 %s76, 1
        %s283 = smul.addr %s282, 4
        %s284 = scalar_lea.vmem [#allocation2], %s283
        // Predicated region
        $region29: #{tpu_custom_call.1} parent=27 // pred_check
          %p285 = pneg %p86
        $region30: #{tpu_custom_call.1} parent=27 // pred_check_branch
          %287 = sbr.rel (%p285) target = $region32
        $region31: #{tpu_custom_call.1} parent=27 // pred_region
          %289 = vsyncadd %s281, 0
          %s290 = smul.addr %s16, 4
          %s291 = scalar_lea.hbm %s2, %s290
          %s293 = sshll.u32 %s284, 4
          %s294 = int_to_ptr.vmem [resolvable:$true] %s293
          %s295 = sshll.u32 %s291, 4
          %s296 = int_to_ptr.hbm [resolvable:$true] %s295
          %298 = dma.vmem_to_hbm [thread:$0]  %s294, 64, %s296, %s281
        $region32: #{tpu_custom_call.1} parent=27 // pred_fallthru
          _
      $region28: #{tpu_custom_call.1} parent=5 // pred_fallthru
        _
      %p299 = scmp.le.s32.totalorder 2, %s11
      // Predicated region
      $region33: #{tpu_custom_call.1} parent=5 // pred_check
        %p300 = pneg %p299
      $region34: #{tpu_custom_call.1} parent=5 // pred_check_branch
        %302 = sbr.rel (%p300) target = $region36
      $region35: #{tpu_custom_call.1} parent=5 // pred_region
        %s303 = ssub.s32 %s11, 2
        // Predicated region
        $region37: #{tpu_custom_call.1} parent=35 // pred_check
          %p304 = pneg %p92
        $region38: #{tpu_custom_call.1} parent=35 // pred_check_branch
          %306 = sbr.rel (%p304) target = $region40
        $region39: #{tpu_custom_call.1} parent=35 // pred_region
          %s307 = sand.u32 %s77, 1
          %s308 = scalar_lea.sflag [#allocation3], %s307
          %s309 = sand.u32 %s77, 1
          %s310 = smul.addr %s309, 4
          %s311 = scalar_lea.vmem [#allocation2], %s310
          %313 = dma.done %s308, 64
        $region40: #{tpu_custom_call.1} parent=35 // pred_fallthru
          _
      $region36: #{tpu_custom_call.1} parent=5 // pred_fallthru
        _
    $region6: #{tpu_custom_call.1} parent=1 // loop_footer
      %s15 = sadd.s32 1, %s11
    $region7: #{tpu_custom_call.1} parent=1 // loop_footer_branch
      %10 = sbr.rel target = $region3
    $region8: #{tpu_custom_call.1} parent=1 // loop_exit
      _
    %314 = vsyncpa [#allocation3], 1
    %s315 = scalar_lea.sflag [#allocation3], 1
    %316 = vsyncpa %s315, 1

</llo_original>
